<compile_context>
chip_gen: v6e
topology: v6e:2x2x1
jax: 0.10.0
libtpu: 0.0.40
codegen_flags: <defaults>
</compile_context>

<pallas_src>
import functools

import jax
import jax.numpy as jnp
from jax import lax
from jax.experimental import pallas as pl
from jax.experimental.pallas import tpu as pltpu


# Safe on every generation (v5e/v6e: 128 MiB physical, v7x: 64 MiB physical).
_VMEM_LIMIT_BYTES = 48 * 1024 * 1024


def _pick_tile(n, target):
    """Largest multiple-of-8 tile <= target that divides n, else full extent."""
    if n <= target:
        return n
    t = (target // 8) * 8
    while t >= 8:
        if n % t == 0:
            return t
        t -= 8
    return n


# ---------------------------------------------------------------------------
# Path 1: exact softmax, returns (output, attn) — matches the module exactly.
# ---------------------------------------------------------------------------
def _attn_weights_kernel(q_ref, k_ref, v_ref, o_ref, attn_ref, *, scale):
    # q_ref: (tq, Dk), k_ref: (Lk, Dk), v_ref: (Lk, Dv) for the current head.
    # scores = scale * (q @ k^T): contract head dim of both operands directly
    # on the MXU (no explicit transpose of k), accumulate in f32.
    s = lax.dot_general(
        q_ref[...], k_ref[...],
        dimension_numbers=(((1,), (1,)), ((), ())),
        preferred_element_type=jnp.float32,
    ) * scale

    # Numerically stable softmax over the key axis (f32 math).
    s = s - jnp.max(s, axis=-1, keepdims=True)
    e = jnp.exp(s)
    p = e * pl.reciprocal(jnp.sum(e, axis=-1, keepdims=True), approx=True)

    attn_ref[...] = p.astype(attn_ref.dtype)

    # output = attn @ v; feed p in v's dtype so the MXU runs in its native
    # (e.g. bf16) precision with f32 accumulation.
    o_ref[...] = jnp.dot(
        p.astype(v_ref.dtype), v_ref[...],
        preferred_element_type=jnp.float32,
    ).astype(o_ref.dtype)


# ---------------------------------------------------------------------------
# Path 2: flash-style online softmax, output only (no O(L^2) HBM traffic).
# ---------------------------------------------------------------------------
def _flash_kernel(q_ref, k_ref, v_ref, o_ref, m_sc, l_sc, acc_sc, *, scale):
    kv = pl.program_id(2)

    @pl.when(kv == 0)
    def _():
        m_sc[...] = jnp.full(m_sc.shape, -jnp.inf, dtype=m_sc.dtype)
        l_sc[...] = jnp.zeros(l_sc.shape, dtype=l_sc.dtype)
        acc_sc[...] = jnp.zeros(acc_sc.shape, dtype=acc_sc.dtype)

    # (tq, tk) scores in f32, operands in their input dtype.
    s = lax.dot_general(
        q_ref[...], k_ref[...],
        dimension_numbers=(((1,), (1,)), ((), ())),
        preferred_element_type=jnp.float32,
    ) * scale

    m_prev = m_sc[...]
    m_new = jnp.maximum(m_prev, jnp.max(s, axis=-1, keepdims=True))
    alpha = jnp.exp(m_prev - m_new)
    p = jnp.exp(s - m_new)

    l_sc[...] = alpha * l_sc[...] + jnp.sum(p, axis=-1, keepdims=True)
    acc_sc[...] = alpha * acc_sc[...] + jnp.dot(
        p.astype(v_ref.dtype), v_ref[...], preferred_element_type=jnp.float32)
    m_sc[...] = m_new

    @pl.when(kv == pl.num_programs(2) - 1)
    def _():
        o_ref[...] = (
            acc_sc[...] * pl.reciprocal(l_sc[...], approx=True)
        ).astype(o_ref.dtype)


# ---------------------------------------------------------------------------
# Wrapper
# ---------------------------------------------------------------------------
def scaled_dot_product_attention(q, k, v, temperature, *,
                                 return_attn=True, tq=256, tk=256):
    """Returns (output, attn) if return_attn else output."""
    B, H, Lq, Dk = q.shape
    Lk = k.shape[2]
    Dv = v.shape[3]
    BH = B * H

    # Fuse batch and head into one leading parallel grid axis.
    q3 = q.reshape(BH, Lq, Dk)
    k3 = k.reshape(BH, Lk, Dk)
    v3 = v.reshape(BH, Lk, Dv)

    scale = 1.0 / float(temperature)
    tq = _pick_tile(Lq, tq)

    if return_attn:
        kernel = functools.partial(_attn_weights_kernel, scale=scale)
        out, attn = pl.pallas_call(
            kernel,
            out_shape=(
                jax.ShapeDtypeStruct((BH, Lq, Dv), q.dtype),
                jax.ShapeDtypeStruct((BH, Lq, Lk), q.dtype),
            ),
            grid=(BH, Lq // tq),
            in_specs=[
                pl.BlockSpec((None, tq, Dk), lambda b, i: (b, i, 0)),
                # K/V blocked only on the head axis -> stay resident across
                # Lq tiles (no re-streaming from HBM per Lq tile).
                pl.BlockSpec((None, Lk, Dk), lambda b, i: (b, 0, 0)),
                pl.BlockSpec((None, Lk, Dv), lambda b, i: (b, 0, 0)),
            ],
            out_specs=(
                pl.BlockSpec((None, tq, Dv), lambda b, i: (b, i, 0)),
                pl.BlockSpec((None, tq, Lk), lambda b, i: (b, i, 0)),
            ),
            compiler_params=pltpu.CompilerParams(
                dimension_semantics=("parallel", "parallel"),
                vmem_limit_bytes=_VMEM_LIMIT_BYTES,
            ),
        )(q3, k3, v3)
        return out.reshape(B, H, Lq, Dv), attn.reshape(B, H, Lq, Lk)

    tk = _pick_tile(Lk, tk)
    kernel = functools.partial(_flash_kernel, scale=scale)
    out = pl.pallas_call(
        kernel,
        out_shape=jax.ShapeDtypeStruct((BH, Lq, Dv), q.dtype),
        grid=(BH, Lq // tq, Lk // tk),
        in_specs=[
            pl.BlockSpec((None, tq, Dk), lambda b, i, j: (b, i, 0)),
            pl.BlockSpec((None, tk, Dk), lambda b, i, j: (b, j, 0)),
            pl.BlockSpec((None, tk, Dv), lambda b, i, j: (b, j, 0)),
        ],
        out_specs=pl.BlockSpec((None, tq, Dv), lambda b, i, j: (b, i, 0)),
        scratch_shapes=[
            pltpu.VMEM((tq, 1), jnp.float32),   # running max m
            pltpu.VMEM((tq, 1), jnp.float32),   # running denom l
            pltpu.VMEM((tq, Dv), jnp.float32),  # output accumulator
        ],
        compiler_params=pltpu.CompilerParams(
            dimension_semantics=("parallel", "parallel", "arbitrary"),
            vmem_limit_bytes=_VMEM_LIMIT_BYTES,
        ),
    )(q3, k3, v3)
    return out.reshape(B, H, Lq, Dv)


if __name__ == "__main__":
    B, H, Lq, Lk, Dk, Dv = 2, 4, 256, 256, 32, 32
    temperature = float(Dk) ** 0.5

    key = jax.random.PRNGKey(0)
    kq, kk, kv = jax.random.split(key, 3)
    q = jax.random.normal(kq, (B, H, Lq, Dk), dtype=jnp.float32)
    k = jax.random.normal(kk, (B, H, Lk, Dk), dtype=jnp.float32)
    v = jax.random.normal(kv, (B, H, Lk, Dv), dtype=jnp.float32)

    # Module-faithful path: (output, attention weights).
    out, attn = scaled_dot_product_attention(q, k, v, temperature,
                                             return_attn=True, tq=128)
    # Output-only flash path (tiled over both Lq and Lk).
    out_flash = scaled_dot_product_attention(q, k, v, temperature,
                                             return_attn=False, tq=128, tk=128)
    jax.block_until_ready((out, attn, out_flash))

    # Plain-JAX reference.
    s_ref = jnp.einsum("bhqd,bhkd->bhqk", q / temperature, k)
    p_ref = jax.nn.softmax(s_ref, axis=-1)
    o_ref = jnp.einsum("bhqk,bhkd->bhqd", p_ref, v)

    assert jnp.allclose(attn, p_ref, atol=2e-3, rtol=2e-3), "attn mismatch"
    assert jnp.allclose(out, o_ref, atol=2e-3, rtol=2e-3), "output mismatch"
    assert jnp.allclose(out_flash, o_ref, atol=2e-3, rtol=2e-3), "flash output mismatch"

    print("KERNEL_OK")
</pallas_src>

<mosaic_0001>
module attributes {stable_mosaic.version = 11 : i64} {
  func.func @_attn_weights_kernel(%arg0: i32, %arg1: i32, %arg2: memref<1x128x32xf32, #tpu.memory_space<vmem>>, %arg3: memref<1x256x32xf32, #tpu.memory_space<vmem>>, %arg4: memref<1x256x32xf32, #tpu.memory_space<vmem>>, %arg5: memref<1x128x32xf32, #tpu.memory_space<vmem>>, %arg6: memref<1x128x256xf32, #tpu.memory_space<vmem>>) attributes {dimension_semantics = [#tpu.dimension_semantics<parallel>, #tpu.dimension_semantics<parallel>], iteration_bounds = array<i64: 8, 2>, scalar_prefetch = 0 : i64, scratch_operands = 0 : i64, tpu.core_type = #tpu.core_type<tc>, window_params = [{transform_indices = @transform_0, window_bounds = array<i64: 1, 128, 32>}, {transform_indices = @transform_1, window_bounds = array<i64: 1, 256, 32>}, {transform_indices = @transform_2, window_bounds = array<i64: 1, 256, 32>}, {transform_indices = @transform_3, window_bounds = array<i64: 1, 128, 32>}, {transform_indices = @transform_4, window_bounds = array<i64: 1, 128, 256>}]} {
    %c0 = arith.constant 0 : index
    %c0_0 = arith.constant 0 : index
    %c0_1 = arith.constant 0 : index
    %0 = vector.load %arg2[%c0, %c0_0, %c0_1] : memref<1x128x32xf32, #tpu.memory_space<vmem>>, vector<1x128x32xf32>
    %1 = vector.shape_cast %0 : vector<1x128x32xf32> to vector<128x32xf32>
    %c0_2 = arith.constant 0 : index
    %c0_3 = arith.constant 0 : index
    %c0_4 = arith.constant 0 : index
    %2 = vector.load %arg3[%c0_2, %c0_3, %c0_4] : memref<1x256x32xf32, #tpu.memory_space<vmem>>, vector<1x256x32xf32>
    %3 = vector.shape_cast %2 : vector<1x256x32xf32> to vector<256x32xf32>
    %cst = arith.constant dense<0.000000e+00> : vector<128x256xf32>
    %4 = tpu.matmul %1, %3, %cst {dimension_numbers = #tpu.dot_dimension_numbers<[1], [1], [0], [0], [0, 0, 1, 0], [], []>} : vector<128x32xf32>, vector<256x32xf32>, vector<128x256xf32> -> vector<128x256xf32>
    %cst_5 = arith.constant 0.176776692 : f32
    %5 = vector.broadcast %cst_5 : f32 to vector<128x256xf32>
    %6 = arith.mulf %4, %5 : vector<128x256xf32>
    %cst_6 = arith.constant dense<0xFF800000> : vector<128xf32>
    %7 = vector.multi_reduction <maximumf>, %6, %cst_6 [1] : vector<128x256xf32> to vector<128xf32>
    %8 = vector.shape_cast %7 : vector<128xf32> to vector<128x1xf32>
    %9 = vector.broadcast %8 : vector<128x1xf32> to vector<128x256xf32>
    %10 = arith.subf %6, %9 : vector<128x256xf32>
    %11 = math.exp %10 : vector<128x256xf32>
    %cst_7 = arith.constant dense<0.000000e+00> : vector<128xf32>
    %12 = vector.multi_reduction <add>, %11, %cst_7 [1] : vector<128x256xf32> to vector<128xf32>
    %13 = vector.shape_cast %12 : vector<128xf32> to vector<128x1xf32>
    %14 = tpu.reciprocal %13 {approx = true} : vector<128x1xf32> -> vector<128x1xf32>
    %15 = vector.broadcast %14 : vector<128x1xf32> to vector<128x256xf32>
    %16 = arith.mulf %11, %15 : vector<128x256xf32>
    %c0_8 = arith.constant 0 : index
    %c0_9 = arith.constant 0 : index
    %c0_10 = arith.constant 0 : index
    %17 = vector.load %arg6[%c0_8, %c0_9, %c0_10] : memref<1x128x256xf32, #tpu.memory_space<vmem>>, vector<1x128x256xf32>
    %18 = vector.shape_cast %17 : vector<1x128x256xf32> to vector<128x256xf32>
    %19 = vector.shape_cast %16 : vector<128x256xf32> to vector<1x128x256xf32>
    tpu.vector_store %arg6[%c0_8, %c0_9, %c0_10], %19 {strides = array<i32>} : memref<1x128x256xf32, #tpu.memory_space<vmem>>, vector<1x128x256xf32>,
    %c0_11 = arith.constant 0 : index
    %c0_12 = arith.constant 0 : index
    %c0_13 = arith.constant 0 : index
    %20 = vector.load %arg4[%c0_11, %c0_12, %c0_13] : memref<1x256x32xf32, #tpu.memory_space<vmem>>, vector<1x256x32xf32>
    %21 = vector.shape_cast %20 : vector<1x256x32xf32> to vector<256x32xf32>
    %cst_14 = arith.constant dense<0.000000e+00> : vector<128x32xf32>
    %22 = tpu.matmul %16, %21, %cst_14 {dimension_numbers = #tpu.dot_dimension_numbers<[1], [0], [0], [1], [0, 0, 1, 1], [], []>} : vector<128x256xf32>, vector<256x32xf32>, vector<128x32xf32> -> vector<128x32xf32>
    %c0_15 = arith.constant 0 : index
    %c0_16 = arith.constant 0 : index
    %c0_17 = arith.constant 0 : index
    %23 = vector.load %arg5[%c0_15, %c0_16, %c0_17] : memref<1x128x32xf32, #tpu.memory_space<vmem>>, vector<1x128x32xf32>
    %24 = vector.shape_cast %23 : vector<1x128x32xf32> to vector<128x32xf32>
    %25 = vector.shape_cast %22 : vector<128x32xf32> to vector<1x128x32xf32>
    tpu.vector_store %arg5[%c0_15, %c0_16, %c0_17], %25 {strides = array<i32>} : memref<1x128x32xf32, #tpu.memory_space<vmem>>, vector<1x128x32xf32>,
    return
  }
  func.func @transform_0(%arg0: i32, %arg1: i32) -> (i32, i32, i32) {
    %c0_i32 = arith.constant 0 : i32
    %c0_i32_0 = arith.constant 0 : i32
    return %arg0, %arg1, %c0_i32 : i32, i32, i32
  }
  func.func @transform_1(%arg0: i32, %arg1: i32) -> (i32, i32, i32) {
    %c0_i32 = arith.constant 0 : i32
    %c0_i32_0 = arith.constant 0 : i32
    %c0_i32_1 = arith.constant 0 : i32
    return %arg0, %c0_i32, %c0_i32_0 : i32, i32, i32
  }
  func.func @transform_2(%arg0: i32, %arg1: i32) -> (i32, i32, i32) {
    %c0_i32 = arith.constant 0 : i32
    %c0_i32_0 = arith.constant 0 : i32
    %c0_i32_1 = arith.constant 0 : i32
    return %arg0, %c0_i32, %c0_i32_0 : i32, i32, i32
  }
  func.func @transform_3(%arg0: i32, %arg1: i32) -> (i32, i32, i32) {
    %c0_i32 = arith.constant 0 : i32
    %c0_i32_0 = arith.constant 0 : i32
    return %arg0, %arg1, %c0_i32 : i32, i32, i32
  }
  func.func @transform_4(%arg0: i32, %arg1: i32) -> (i32, i32, i32) {
    %c0_i32 = arith.constant 0 : i32
    %c0_i32_0 = arith.constant 0 : i32
    return %arg0, %arg1, %c0_i32 : i32, i32, i32
  }
}

</mosaic_0001>

<llo_original>
// kernel: tpu_custom_call.1
$region0: #{tpu_custom_call.1}
  #allocation0 [shape = 'u32[]', space=smem, size = 0x4, offset = 0x4, fixed_abs, tag = 'smem constant byte address 0x4 - core index']
  #allocation1 [shape = 'u32[144,128]{1,0:T(1,128)}', space=vmem, size = 0x12000, scoped, tag = 'internal scratch']
  %s0 = inlined_call_operand.vmem [shape: f32[8,256,32], index: 0, kind: input, shape index: {}]
  %s1 = inlined_call_operand.vmem [shape: f32[8,256,32], index: 1, kind: input, shape index: {}]
  %s2 = inlined_call_operand.vmem [shape: f32[8,256,32], index: 2, kind: input, shape index: {}]
  %s3 = inlined_call_operand.vmem [shape: f32[8,256,32], index: 3, kind: output, shape index: {0}]
  %s4 = inlined_call_operand.hbm [shape: f32[8,256,256], index: 4, kind: output, shape index: {1}]
  %5 = xla_tuple %s3, %s4
  %s6 = sld [smem:[#allocation0]]
  $region53: #{tpu_custom_call.1} parent=0
    _
  %s8 = ssub.s32 1, %s6
  %s9 = scalar_select 0, %s8, %s6
  $region1: #{tpu_custom_call.1} parent=0
    #allocation2 [shape = 'u8[262144]{0}', space=vmem, size = 0x40000, scoped, tag = 'output window, operand 1']
    #allocation3 [shape = 's32[2]{0}', space=sflag, size = 0x8, scoped, tag = 'scoped memory for tpu_custom_call.1']
    %10 = vsyncpa [#allocation3], 0
    %s11 = scalar_lea.sflag [#allocation3], 1
    %12 = vsyncpa %s11, 0
    loop: start=0, step=1, limit=18
    $region2: #{tpu_custom_call.1} parent=1 // loop_pre_header
      _
    $region3: #{tpu_custom_call.1} parent=1 // loop_header
      %s14 = sphi 0, %s18
      %p15 = scmp.ge.s32.totalorder %s14, 18
      %s21 = sphi 0, %s33
      %s22 = sphi 0, %s29
      %s23 = sphi 0, %s21
      %s24 = sphi 0, %s22
      %s25 = sphi 0, %s23
      %s26 = sphi 0, %s24
      %s38 = sphi 0, %s40
      %s41 = sphi 0, %s38
      %s42 = sphi 0, %s41
      %s58 = sphi 0, %s42
      %s64 = sphi 0, %s66
      %s67 = sphi 0, %s64
      %s68 = sphi 0, %s67
      %s84 = sphi 0, %s68
      %s90 = sphi 0, %s92
      %s93 = sphi 0, %s90
      %s94 = sphi 0, %s93
      %s110 = sphi 0, %s94
      %s118 = sphi 0, %s120
      %s121 = sphi 0, %s118
      %s122 = sphi 0, %s121
      %s138 = sphi 0, %s122
      %s146 = sphi 0, %s148
      %s149 = sphi 0, %s146
      %s150 = sphi 0, %s149
      %s166 = sphi 0, %s150
    $region4: #{tpu_custom_call.1} parent=1 // loop_header_branch
      %17 = sbr.rel (%p15) target = $region8
    $region5: #{tpu_custom_call.1} parent=1 // loop_body
      %s19 = ssub.s32 %s14, 1
      %s20 = ssub.s32 %s14, 2
      %s27 = sadd.s32 1, %s22
      %p28 = scmp.ge.s32.totalorder %s27, 2
      %s29 = scalar_select %p28, 0, %s27
      %s30 = sadd.s32 1, %s21
      %s31 = scalar_select %p28, %s30, %s21
      %p32 = scmp.ge.s32.totalorder %s31, 8
      %s33 = scalar_select %p32, 0, %s31
      %s34 = ssub.s32 %s21, %s33
      %s35 = ssub.s32 %s22, %s29
      %s36 = sor.u32 %s34, %s35
      %p37 = scmp.eq.s32.totalorder %s36, 0
      %s39 = sadd.s32 %s38, 1
      %s40 = scalar_select %p37, %s38, %s39
      %p43 = pneg %p37
      %p44 = scmp.eq.s32.totalorder %s14, 15
      %p45 = por %p43, %p44
      %p46 = scmp.ne.s32.totalorder %s38, %s41
      %p47 = scmp.eq.s32.totalorder %s14, 0
      %p48 = por %p46, %p47
      %p49 = scmp.ne.s32.totalorder %s38, %s41
      %p50 = scmp.eq.s32.totalorder %s19, 15
      %p51 = por %p49, %p50
      %p52 = scmp.ne.s32.totalorder %s41, %s42
      %p53 = scmp.eq.s32.totalorder %s19, 0
      %p54 = por %p52, %p53
      %p55 = scmp.ne.s32.totalorder %s41, %s42
      %p56 = scmp.eq.s32.totalorder %s20, 15
      %p57 = por %p55, %p56
      %p59 = scmp.ne.s32.totalorder %s42, %s58
      %p60 = scmp.eq.s32.totalorder %s20, 0
      %p61 = por %p59, %p60
      %s62 = ssub.s32 %s21, %s33
      %p63 = scmp.eq.s32.totalorder %s62, 0
      %s65 = sadd.s32 %s64, 1
      %s66 = scalar_select %p63, %s64, %s65
      %p69 = pneg %p63
      %p70 = scmp.eq.s32.totalorder %s14, 15
      %p71 = por %p69, %p70
      %p72 = scmp.ne.s32.totalorder %s64, %s67
      %p73 = scmp.eq.s32.totalorder %s14, 0
      %p74 = por %p72, %p73
      %p75 = scmp.ne.s32.totalorder %s64, %s67
      %p76 = scmp.eq.s32.totalorder %s19, 15
      %p77 = por %p75, %p76
      %p78 = scmp.ne.s32.totalorder %s67, %s68
      %p79 = scmp.eq.s32.totalorder %s19, 0
      %p80 = por %p78, %p79
      %p81 = scmp.ne.s32.totalorder %s67, %s68
      %p82 = scmp.eq.s32.totalorder %s20, 15
      %p83 = por %p81, %p82
      %p85 = scmp.ne.s32.totalorder %s68, %s84
      %p86 = scmp.eq.s32.totalorder %s20, 0
      %p87 = por %p85, %p86
      %s88 = ssub.s32 %s21, %s33
      %p89 = scmp.eq.s32.totalorder %s88, 0
      %s91 = sadd.s32 %s90, 1
      %s92 = scalar_select %p89, %s90, %s91
      %p95 = pneg %p89
      %p96 = scmp.eq.s32.totalorder %s14, 15
      %p97 = por %p95, %p96
      %p98 = scmp.ne.s32.totalorder %s90, %s93
      %p99 = scmp.eq.s32.totalorder %s14, 0
      %p100 = por %p98, %p99
      %p101 = scmp.ne.s32.totalorder %s90, %s93
      %p102 = scmp.eq.s32.totalorder %s19, 15
      %p103 = por %p101, %p102
      %p104 = scmp.ne.s32.totalorder %s93, %s94
      %p105 = scmp.eq.s32.totalorder %s19, 0
      %p106 = por %p104, %p105
      %p107 = scmp.ne.s32.totalorder %s93, %s94
      %p108 = scmp.eq.s32.totalorder %s20, 15
      %p109 = por %p107, %p108
      %p111 = scmp.ne.s32.totalorder %s94, %s110
      %p112 = scmp.eq.s32.totalorder %s20, 0
      %p113 = por %p111, %p112
      %s114 = ssub.s32 %s21, %s33
      %s115 = ssub.s32 %s22, %s29
      %s116 = sor.u32 %s114, %s115
      %p117 = scmp.eq.s32.totalorder %s116, 0
      %s119 = sadd.s32 %s118, 1
      %s120 = scalar_select %p117, %s118, %s119
      %p123 = pneg %p117
      %p124 = scmp.eq.s32.totalorder %s14, 15
      %p125 = por %p123, %p124
      %p126 = scmp.ne.s32.totalorder %s118, %s121
      %p127 = scmp.eq.s32.totalorder %s14, 0
      %p128 = por %p126, %p127
      %p129 = scmp.ne.s32.totalorder %s118, %s121
      %p130 = scmp.eq.s32.totalorder %s19, 15
      %p131 = por %p129, %p130
      %p132 = scmp.ne.s32.totalorder %s121, %s122
      %p133 = scmp.eq.s32.totalorder %s19, 0
      %p134 = por %p132, %p133
      %p135 = scmp.ne.s32.totalorder %s121, %s122
      %p136 = scmp.eq.s32.totalorder %s20, 15
      %p137 = por %p135, %p136
      %p139 = scmp.ne.s32.totalorder %s122, %s138
      %p140 = scmp.eq.s32.totalorder %s20, 0
      %p141 = por %p139, %p140
      %s142 = ssub.s32 %s21, %s33
      %s143 = ssub.s32 %s22, %s29
      %s144 = sor.u32 %s142, %s143
      %p145 = scmp.eq.s32.totalorder %s144, 0
      %s147 = sadd.s32 %s146, 1
      %s148 = scalar_select %p145, %s146, %s147
      %p151 = pneg %p145
      %p152 = scmp.eq.s32.totalorder %s14, 15
      %p153 = por %p151, %p152
      %p154 = scmp.ne.s32.totalorder %s146, %s149
      %p155 = scmp.eq.s32.totalorder %s14, 0
      %p156 = por %p154, %p155
      %p157 = scmp.ne.s32.totalorder %s146, %s149
      %p158 = scmp.eq.s32.totalorder %s19, 15
      %p159 = por %p157, %p158
      %p160 = scmp.ne.s32.totalorder %s149, %s150
      %p161 = scmp.eq.s32.totalorder %s19, 0
      %p162 = por %p160, %p161
      %p163 = scmp.ne.s32.totalorder %s149, %s150
      %p164 = scmp.eq.s32.totalorder %s20, 15
      %p165 = por %p163, %p164
      %p167 = scmp.ne.s32.totalorder %s150, %s166
      %p168 = scmp.eq.s32.totalorder %s20, 0
      %p169 = por %p167, %p168
      %p170 = scmp.le.s32.totalorder 1, %s14
      %p171 = scmp.lt.s32.totalorder %s14, 17
      %p172 = pnand %p170, %p171
      %p173 = pneg %p172
      // Predicated region
      $region9: #{tpu_custom_call.1} parent=5 // pred_check
        _
      $region10: #{tpu_custom_call.1} parent=5 // pred_check_branch
        %175 = sbr.rel (%p172) target = $region12
      $region11: #{tpu_custom_call.1} parent=5 // pred_region
        %s176 = ssub.s32 %s14, 1
      $region12: #{tpu_custom_call.1} parent=5 // pred_fallthru
        _
      %p177 = scmp.lt.s32.totalorder %s14, 16
      // Predicated region
      $region13: #{tpu_custom_call.1} parent=5 // pred_check
        %p178 = pneg %p177
      $region14: #{tpu_custom_call.1} parent=5 // pred_check_branch
        %180 = sbr.rel (%p178) target = $region16
      $region15: #{tpu_custom_call.1} parent=5 // pred_region
        // Predicated region
        $region17: #{tpu_custom_call.1} parent=15 // pred_check
          %p181 = pneg %p48
        $region18: #{tpu_custom_call.1} parent=15 // pred_check_branch
          %183 = sbr.rel (%p181) target = $region20
        $region19: #{tpu_custom_call.1} parent=15 // pred_region
          %s184 = smul.u32 16, %s22
          %p185 = scmp.lt.s32.totalorder %s21, 7
          %s186 = scalar_select %p185, %s21, 7
          %p187 = scmp.lt.s32.totalorder %s184, 31
          %s188 = scalar_select %p187, %s184, 31
          %s189 = smul.addr %s186, 32
          %s190 = sadd.s32 %s188, %s189
          %s191 = smul.addr %s190, 8
          %s192 = scalar_lea.vmem %s0, %s191
          %s193 = smul.u32 16, %s22
        $region20: #{tpu_custom_call.1} parent=15 // pred_fallthru
          _
        // Predicated region
        $region21: #{tpu_custom_call.1} parent=15 // pred_check
          %p194 = pneg %p74
        $region22: #{tpu_custom_call.1} parent=15 // pred_check_branch
          %196 = sbr.rel (%p194) target = $region24
        $region23: #{tpu_custom_call.1} parent=15 // pred_region
          %p197 = scmp.lt.s32.totalorder %s21, 7
          %s198 = scalar_select %p197, %s21, 7
          %s199 = smul.addr %s198, 32
          %s200 = smul.addr %s199, 8
          %s201 = scalar_lea.vmem %s1, %s200
        $region24: #{tpu_custom_call.1} parent=15 // pred_fallthru
          _
        // Predicated region
        $region25: #{tpu_custom_call.1} parent=15 // pred_check
          %p202 = pneg %p100
        $region26: #{tpu_custom_call.1} parent=15 // pred_check_branch
          %204 = sbr.rel (%p202) target = $region28
        $region27: #{tpu_custom_call.1} parent=15 // pred_region
          %p205 = scmp.lt.s32.totalorder %s21, 7
          %s206 = scalar_select %p205, %s21, 7
          %s207 = smul.addr %s206, 32
          %s208 = smul.addr %s207, 8
          %s209 = scalar_lea.vmem %s2, %s208
        $region28: #{tpu_custom_call.1} parent=15 // pred_fallthru
          _
      $region16: #{tpu_custom_call.1} parent=5 // pred_fallthru
        _
      %p210 = scmp.le.s32.totalorder 1, %s14
      %p211 = scmp.lt.s32.totalorder %s14, 17
      %p212 = pnand %p210, %p211
      %p213 = pneg %p212
      // Predicated region
      $region29: #{tpu_custom_call.1} parent=5 // pred_check
        _
      $region30: #{tpu_custom_call.1} parent=5 // pred_check_branch
        %215 = sbr.rel (%p212) target = $region32
      $region31: #{tpu_custom_call.1} parent=5 // pred_region
        %s216 = ssub.s32 %s14, 1
        %s217 = smul.u32 16, %s24
        %p218 = scmp.lt.s32.totalorder %s23, 7
        %s219 = scalar_select %p218, %s23, 7
        %p220 = scmp.lt.s32.totalorder %s217, 31
        %s221 = scalar_select %p220, %s217, 31
        %s222 = smul.addr %s219, 32
        %s223 = sadd.s32 %s221, %s222
        %s224 = smul.addr %s223, 8
        %s225 = scalar_lea.vmem %s0, %s224
        %p226 = pneg %p54
        %p227 = pneg %p51
        %p228 = scmp.lt.s32.totalorder %s23, 7
        %s229 = scalar_select %p228, %s23, 7
        %s230 = smul.addr %s229, 32
        %s231 = smul.addr %s230, 8
        %s232 = scalar_lea.vmem %s1, %s231
        %p233 = pneg %p80
        %p234 = pneg %p77
        %p235 = scmp.lt.s32.totalorder %s23, 7
        %s236 = scalar_select %p235, %s23, 7
        %s237 = smul.addr %s236, 32
        %s238 = smul.addr %s237, 8
        %s239 = scalar_lea.vmem %s2, %s238
        %p240 = pneg %p106
        %p241 = pneg %p103
        %p242 = pneg %p134
        %p243 = pneg %p131
        %s244 = smul.u32 16, %s24
        %p245 = scmp.lt.s32.totalorder %s23, 7
        %s246 = scalar_select %p245, %s23, 7
        %p247 = scmp.lt.s32.totalorder %s244, 31
        %s248 = scalar_select %p247, %s244, 31
        %s249 = smul.addr %s246, 32
        %s250 = sadd.s32 %s248, %s249
        %s251 = smul.addr %s250, 8
        %s252 = scalar_lea.vmem %s3, %s251
        %p253 = pneg %p162
        %p254 = pneg %p159
        %s255 = sand.u32 %s149, 1
        %s256 = scalar_lea.sflag [#allocation3], %s255
        %s257 = sand.u32 %s149, 1
        %s258 = smul.addr %s257, 256
        %s259 = scalar_lea.vmem [#allocation2], %s258
        %s260 = smul.u32 16, %s24
        %p261 = scmp.lt.s32.totalorder %s23, 7
        %s262 = scalar_select %p261, %s23, 7
        %p263 = scmp.lt.s32.totalorder %s260, 31
        %s264 = scalar_select %p263, %s260, 31
        %s265 = smul.addr %s262, 32
        %s266 = sadd.s32 %s264, %s265
        %s267 = smul.addr %s266, 8
        %s268 = scalar_lea.vmem %s0, %s267
        %s269 = smul.u32 16, %s24
        %p270 = scmp.lt.s32.totalorder %s23, 7
        %s271 = scalar_select %p270, %s23, 7
        %s272 = smul.addr %s271, 32
        %s273 = smul.addr %s272, 8
        %s274 = scalar_lea.vmem %s1, %s273
        %p275 = scmp.lt.s32.totalorder %s23, 7
        %s276 = scalar_select %p275, %s23, 7
        %s277 = smul.addr %s276, 32
        %s278 = smul.addr %s277, 8
        %s279 = scalar_lea.vmem %s2, %s278
        %s280 = smul.u32 16, %s24
        %p281 = scmp.lt.s32.totalorder %s23, 7
        %s282 = scalar_select %p281, %s23, 7
        %p283 = scmp.lt.s32.totalorder %s280, 31
        %s284 = scalar_select %p283, %s280, 31
        %s285 = smul.addr %s282, 32
        %s286 = sadd.s32 %s284, %s285
        %s287 = smul.addr %s286, 8
        %s288 = scalar_lea.vmem %s3, %s287
        %s289 = smul.u32 16, %s24
        %s290 = smul.u32 16, %s24
        %v291 = vld [vmem:[%s268] sm:$0xff]
        %v292 = vld [vmem:[%s268 + $0x8] sm:$0xff]
        %v293 = vld [vmem:[%s268 + $0x10] sm:$0xff]
        %v294 = vld [vmem:[%s268 + $0x18] sm:$0xff]
        %v295 = vld [vmem:[%s268 + $0x20] sm:$0xff]
        %v296 = vld [vmem:[%s268 + $0x28] sm:$0xff]
        %v297 = vld [vmem:[%s268 + $0x30] sm:$0xff]
        %v298 = vld [vmem:[%s268 + $0x38] sm:$0xff]
        %v299 = vld [vmem:[%s268 + $0x40] sm:$0xff]
        %v300 = vld [vmem:[%s268 + $0x48] sm:$0xff]
        %v301 = vld [vmem:[%s268 + $0x50] sm:$0xff]
        %v302 = vld [vmem:[%s268 + $0x58] sm:$0xff]
        %v303 = vld [vmem:[%s268 + $0x60] sm:$0xff]
        %v304 = vld [vmem:[%s268 + $0x68] sm:$0xff]
        %v305 = vld [vmem:[%s268 + $0x70] sm:$0xff]
        %v306 = vld [vmem:[%s268 + $0x78] sm:$0xff]
        %v307 = vld [vmem:[%s274] sm:$0xff]
        %v308 = vld [vmem:[%s274 + $0x8] sm:$0xff]
        %v309 = vld [vmem:[%s274 + $0x10] sm:$0xff]
        %v310 = vld [vmem:[%s274 + $0x18] sm:$0xff]
        %v311 = vld [vmem:[%s274 + $0x20] sm:$0xff]
        %v312 = vld [vmem:[%s274 + $0x28] sm:$0xff]
        %v313 = vld [vmem:[%s274 + $0x30] sm:$0xff]
        %v314 = vld [vmem:[%s274 + $0x38] sm:$0xff]
        %v315 = vld [vmem:[%s274 + $0x40] sm:$0xff]
        %v316 = vld [vmem:[%s274 + $0x48] sm:$0xff]
        %v317 = vld [vmem:[%s274 + $0x50] sm:$0xff]
        %v318 = vld [vmem:[%s274 + $0x58] sm:$0xff]
        %v319 = vld [vmem:[%s274 + $0x60] sm:$0xff]
        %v320 = vld [vmem:[%s274 + $0x68] sm:$0xff]
        %v321 = vld [vmem:[%s274 + $0x70] sm:$0xff]
        %v322 = vld [vmem:[%s274 + $0x78] sm:$0xff]
        %v323 = vld [vmem:[%s274 + $0x80] sm:$0xff]
        %v324 = vld [vmem:[%s274 + $0x88] sm:$0xff]
        %v325 = vld [vmem:[%s274 + $0x90] sm:$0xff]
        %v326 = vld [vmem:[%s274 + $0x98] sm:$0xff]
        %v327 = vld [vmem:[%s274 + $0xa0] sm:$0xff]
        %v328 = vld [vmem:[%s274 + $0xa8] sm:$0xff]
        %v329 = vld [vmem:[%s274 + $0xb0] sm:$0xff]
        %v330 = vld [vmem:[%s274 + $0xb8] sm:$0xff]
        %v331 = vld [vmem:[%s274 + $0xc0] sm:$0xff]
        %v332 = vld [vmem:[%s274 + $0xc8] sm:$0xff]
        %v333 = vld [vmem:[%s274 + $0xd0] sm:$0xff]
        %v334 = vld [vmem:[%s274 + $0xd8] sm:$0xff]
        %v335 = vld [vmem:[%s274 + $0xe0] sm:$0xff]
        %v336 = vld [vmem:[%s274 + $0xe8] sm:$0xff]
        %v337 = vld [vmem:[%s274 + $0xf0] sm:$0xff]
        %v338 = vld [vmem:[%s274 + $0xf8] sm:$0xff]
        %vm339 = vcmask 261120
        %v341 = vsel %vm339, %v291, 0
        %v344 = vsel %vm339, %v292, 0
        %v347 = vsel %vm339, %v293, 0
        %v350 = vsel %vm339, %v294, 0
        %v353 = vsel %vm339, %v295, 0
        %v356 = vsel %vm339, %v296, 0
        %v359 = vsel %vm339, %v297, 0
        %v362 = vsel %vm339, %v298, 0
        %v365 = vsel %vm339, %v299, 0
        %v368 = vsel %vm339, %v300, 0
        %v371 = vsel %vm339, %v301, 0
        %v374 = vsel %vm339, %v302, 0
        %v377 = vsel %vm339, %v303, 0
        %v380 = vsel %vm339, %v304, 0
        %v383 = vsel %vm339, %v305, 0
        %v386 = vsel %vm339, %v306, 0
        %v389 = vsel %vm339, %v307, 0
        %v392 = vsel %vm339, %v308, 0
        %v395 = vsel %vm339, %v309, 0
        %v398 = vsel %vm339, %v310, 0
        %v401 = vsel %vm339, %v311, 0
        %v404 = vsel %vm339, %v312, 0
        %v407 = vsel %vm339, %v313, 0
        %v410 = vsel %vm339, %v314, 0
        %v413 = vsel %vm339, %v315, 0
        %v416 = vsel %vm339, %v316, 0
        %v419 = vsel %vm339, %v317, 0
        %v422 = vsel %vm339, %v318, 0
        %v425 = vsel %vm339, %v319, 0
        %v428 = vsel %vm339, %v320, 0
        %v431 = vsel %vm339, %v321, 0
        %v434 = vsel %vm339, %v322, 0
        %v437 = vsel %vm339, %v323, 0
        %v440 = vsel %vm339, %v324, 0
        %v443 = vsel %vm339, %v325, 0
        %v446 = vsel %vm339, %v326, 0
        %v449 = vsel %vm339, %v327, 0
        %v452 = vsel %vm339, %v328, 0
        %v455 = vsel %vm339, %v329, 0
        %v458 = vsel %vm339, %v330, 0
        %v461 = vsel %vm339, %v331, 0
        %v464 = vsel %vm339, %v332, 0
        %v467 = vsel %vm339, %v333, 0
        %v470 = vsel %vm339, %v334, 0
        %v473 = vsel %vm339, %v335, 0
        %v476 = vsel %vm339, %v336, 0
        %v479 = vsel %vm339, %v337, 0
        %v482 = vsel %vm339, %v338, 0
        %484 = vmatprep.subr.mxu0 0.0
        %485 = vmatpush1.xpose.msra.mxu0 %v434
        %486 = vmatprep.subr.mxu0 0.0
        %487 = vmatpush1.xpose.msra.mxu0 %v431
        %488 = vmatprep.subr.mxu0 0.0
        %489 = vmatpush1.xpose.msra.mxu0 %v428
        %490 = vmatprep.subr.mxu0 0.0
        %491 = vmatpush1.xpose.msra.mxu0 %v425
        %492 = vmatprep.subr.mxu0 0.0
        %493 = vmatpush1.xpose.msra.mxu0 %v422
        %494 = vmatprep.subr.mxu0 0.0
        %495 = vmatpush1.xpose.msra.mxu0 %v419
        %496 = vmatprep.subr.mxu0 0.0
        %497 = vmatpush1.xpose.msra.mxu0 %v416
        %498 = vmatprep.subr.mxu0 0.0
        %499 = vmatpush1.xpose.msra.mxu0 %v413
        %500 = vmatprep.subr.mxu0 0.0
        %501 = vmatpush1.xpose.msra.mxu0 %v410
        %502 = vmatprep.subr.mxu0 0.0
        %503 = vmatpush1.xpose.msra.mxu0 %v407
        %504 = vmatprep.subr.mxu0 0.0
        %505 = vmatpush1.xpose.msra.mxu0 %v404
        %506 = vmatprep.subr.mxu0 0.0
        %507 = vmatpush1.xpose.msra.mxu0 %v401
        %508 = vmatprep.subr.mxu0 0.0
        %509 = vmatpush1.xpose.msra.mxu0 %v398
        %510 = vmatprep.subr.mxu0 0.0
        %511 = vmatpush1.xpose.msra.mxu0 %v395
        %512 = vmatprep.subr.mxu0 0.0
        %513 = vmatpush1.xpose.msra.mxu0 %v392
        %514 = vmatprep.subr.mxu0 0.0
        %515 = vmatpush1.xpose.msra.mxu0 %v389
        %516 = vmatprep.subr.mxu0 0.0
        %517 = vmatpush2.xpose.msra.mxu0 %v482
        %518 = vmatprep.subr.mxu0 0.0
        %519 = vmatpush2.xpose.msra.mxu0 %v479
        %520 = vmatprep.subr.mxu0 0.0
        %521 = vmatpush2.xpose.msra.mxu0 %v476
        %522 = vmatprep.subr.mxu0 0.0
        %523 = vmatpush2.xpose.msra.mxu0 %v473
        %524 = vmatprep.subr.mxu0 0.0
        %525 = vmatpush2.xpose.msra.mxu0 %v470
        %526 = vmatprep.subr.mxu0 0.0
        %527 = vmatpush2.xpose.msra.mxu0 %v467
        %528 = vmatprep.subr.mxu0 0.0
        %529 = vmatpush2.xpose.msra.mxu0 %v464
        %530 = vmatprep.subr.mxu0 0.0
        %531 = vmatpush2.xpose.msra.mxu0 %v461
        %532 = vmatprep.subr.mxu0 0.0
        %533 = vmatpush2.xpose.msra.mxu0 %v458
        %534 = vmatprep.subr.mxu0 0.0
        %535 = vmatpush2.xpose.msra.mxu0 %v455
        %536 = vmatprep.subr.mxu0 0.0
        %537 = vmatpush2.xpose.msra.mxu0 %v452
        %538 = vmatprep.subr.mxu0 0.0
        %539 = vmatpush2.xpose.msra.mxu0 %v449
        %540 = vmatprep.subr.mxu0 0.0
        %541 = vmatpush2.xpose.msra.mxu0 %v446
        %542 = vmatprep.subr.mxu0 0.0
        %543 = vmatpush2.xpose.msra.mxu0 %v443
        %544 = vmatprep.subr.mxu0 0.0
        %545 = vmatpush2.xpose.msra.mxu0 %v440
        %546 = vmatprep.subr.mxu0 0.0
        %547 = vmatpush2.xpose.msra.mxu0 %v437
        %548 = vmatprep.mubr.f32.mxu0 0.0
        %549 = vmatmul.mubr.f32.gmra.mxu0 %v341
        %v550 = vpop.f32.mrf.mxu0
        %v551 = vadd.f32 0.0, %v550
        %v552 = vpop.f32.mrf.mxu0
        %v553 = vadd.f32 0.0, %v552
        %554 = vmatprep.mubr.f32.mxu0 0.0
        %555 = vmatmul.mubr.f32.gmra.mxu0 %v344
        %v556 = vpop.f32.mrf.mxu0
        %v557 = vadd.f32 0.0, %v556
        %v558 = vpop.f32.mrf.mxu0
        %v559 = vadd.f32 0.0, %v558
        %560 = vmatprep.mubr.f32.mxu0 0.0
        %561 = vmatmul.mubr.f32.gmra.mxu0 %v347
        %v562 = vpop.f32.mrf.mxu0
        %v563 = vadd.f32 0.0, %v562
        %v564 = vpop.f32.mrf.mxu0
        %v565 = vadd.f32 0.0, %v564
        %566 = vmatprep.mubr.f32.mxu0 0.0
        %567 = vmatmul.mubr.f32.gmra.mxu0 %v350
        %v568 = vpop.f32.mrf.mxu0
        %v569 = vadd.f32 0.0, %v568
        %v570 = vpop.f32.mrf.mxu0
        %v571 = vadd.f32 0.0, %v570
        %572 = vmatprep.mubr.f32.mxu0 0.0
        %573 = vmatmul.mubr.f32.gmra.mxu0 %v353
        %v574 = vpop.f32.mrf.mxu0
        %v575 = vadd.f32 0.0, %v574
        %v576 = vpop.f32.mrf.mxu0
        %v577 = vadd.f32 0.0, %v576
        %578 = vmatprep.mubr.f32.mxu0 0.0
        %579 = vmatmul.mubr.f32.gmra.mxu0 %v356
        %v580 = vpop.f32.mrf.mxu0
        %v581 = vadd.f32 0.0, %v580
        %v582 = vpop.f32.mrf.mxu0
        %v583 = vadd.f32 0.0, %v582
        %584 = vmatprep.mubr.f32.mxu0 0.0
        %585 = vmatmul.mubr.f32.gmra.mxu0 %v359
        %v586 = vpop.f32.mrf.mxu0
        %v587 = vadd.f32 0.0, %v586
        %v588 = vpop.f32.mrf.mxu0
        %v589 = vadd.f32 0.0, %v588
        %590 = vmatprep.mubr.f32.mxu0 0.0
        %591 = vmatmul.mubr.f32.gmra.mxu0 %v362
        %v592 = vpop.f32.mrf.mxu0
        %v593 = vadd.f32 0.0, %v592
        %v594 = vpop.f32.mrf.mxu0
        %v595 = vadd.f32 0.0, %v594
        %596 = vmatprep.mubr.f32.mxu0 0.0
        %597 = vmatmul.mubr.f32.gmra.mxu0 %v365
        %v598 = vpop.f32.mrf.mxu0
        %v599 = vadd.f32 0.0, %v598
        %v600 = vpop.f32.mrf.mxu0
        %v601 = vadd.f32 0.0, %v600
        %602 = vmatprep.mubr.f32.mxu0 0.0
        %603 = vmatmul.mubr.f32.gmra.mxu0 %v368
        %v604 = vpop.f32.mrf.mxu0
        %v605 = vadd.f32 0.0, %v604
        %v606 = vpop.f32.mrf.mxu0
        %v607 = vadd.f32 0.0, %v606
        %608 = vmatprep.mubr.f32.mxu0 0.0
        %609 = vmatmul.mubr.f32.gmra.mxu0 %v371
        %v610 = vpop.f32.mrf.mxu0
        %v611 = vadd.f32 0.0, %v610
        %v612 = vpop.f32.mrf.mxu0
        %v613 = vadd.f32 0.0, %v612
        %614 = vmatprep.mubr.f32.mxu0 0.0
        %615 = vmatmul.mubr.f32.gmra.mxu0 %v374
        %v616 = vpop.f32.mrf.mxu0
        %v617 = vadd.f32 0.0, %v616
        %v618 = vpop.f32.mrf.mxu0
        %v619 = vadd.f32 0.0, %v618
        %620 = vmatprep.mubr.f32.mxu0 0.0
        %621 = vmatmul.mubr.f32.gmra.mxu0 %v377
        %v622 = vpop.f32.mrf.mxu0
        %v623 = vadd.f32 0.0, %v622
        %v624 = vpop.f32.mrf.mxu0
        %v625 = vadd.f32 0.0, %v624
        %626 = vmatprep.mubr.f32.mxu0 0.0
        %627 = vmatmul.mubr.f32.gmra.mxu0 %v380
        %v628 = vpop.f32.mrf.mxu0
        %v629 = vadd.f32 0.0, %v628
        %v630 = vpop.f32.mrf.mxu0
        %v631 = vadd.f32 0.0, %v630
        %632 = vmatprep.mubr.f32.mxu0 0.0
        %633 = vmatmul.mubr.f32.gmra.mxu0 %v383
        %v634 = vpop.f32.mrf.mxu0
        %v635 = vadd.f32 0.0, %v634
        %v636 = vpop.f32.mrf.mxu0
        %v637 = vadd.f32 0.0, %v636
        %638 = vmatprep.mubr.f32.mxu0 0.0
        %639 = vmatmul.mubr.f32.gmra.mxu0 %v386
        %v640 = vpop.f32.mrf.mxu0
        %v641 = vadd.f32 0.0, %v640
        %v642 = vpop.f32.mrf.mxu0
        %v643 = vadd.f32 0.0, %v642
        %644 = vdwg.mxu0
        %v645 = vmul.f32 %v551, 0.17677669
        %v646 = vmul.f32 %v553, 0.17677669
        %v647 = vmul.f32 %v557, 0.17677669
        %v648 = vmul.f32 %v559, 0.17677669
        %v649 = vmul.f32 %v563, 0.17677669
        %v650 = vmul.f32 %v565, 0.17677669
        %v651 = vmul.f32 %v569, 0.17677669
        %v652 = vmul.f32 %v571, 0.17677669
        %v653 = vmul.f32 %v575, 0.17677669
        %v654 = vmul.f32 %v577, 0.17677669
        %v655 = vmul.f32 %v581, 0.17677669
        %v656 = vmul.f32 %v583, 0.17677669
        %v657 = vmul.f32 %v587, 0.17677669
        %v658 = vmul.f32 %v589, 0.17677669
        %v659 = vmul.f32 %v593, 0.17677669
        %v660 = vmul.f32 %v595, 0.17677669
        %v661 = vmul.f32 %v599, 0.17677669
        %v662 = vmul.f32 %v601, 0.17677669
        %v663 = vmul.f32 %v605, 0.17677669
        %v664 = vmul.f32 %v607, 0.17677669
        %v665 = vmul.f32 %v611, 0.17677669
        %v666 = vmul.f32 %v613, 0.17677669
        %v667 = vmul.f32 %v617, 0.17677669
        %v668 = vmul.f32 %v619, 0.17677669
        %v669 = vmul.f32 %v623, 0.17677669
        %v670 = vmul.f32 %v625, 0.17677669
        %v671 = vmul.f32 %v629, 0.17677669
        %v672 = vmul.f32 %v631, 0.17677669
        %v673 = vmul.f32 %v635, 0.17677669
        %v674 = vmul.f32 %v637, 0.17677669
        %v675 = vmul.f32 %v641, 0.17677669
        %v676 = vmul.f32 %v643, 0.17677669
        %v677 = vmax.f32 %v645, %v646
        %678 = vmax.xlane.f32.xlu0 %v677
        %v679 = vpop.xlane.xlu0 %678
        %v680 = vmax.f32 %v647, %v648
        %681 = vmax.xlane.f32.xlu0 %v680
        %v682 = vpop.xlane.xlu0 %681
        %v683 = vmax.f32 %v649, %v650
        %684 = vmax.xlane.f32.xlu0 %v683
        %v685 = vpop.xlane.xlu0 %684
        %v686 = vmax.f32 %v651, %v652
        %687 = vmax.xlane.f32.xlu0 %v686
        %v688 = vpop.xlane.xlu0 %687
        %v689 = vmax.f32 %v653, %v654
        %690 = vmax.xlane.f32.xlu0 %v689
        %v691 = vpop.xlane.xlu0 %690
        %v692 = vmax.f32 %v655, %v656
        %693 = vmax.xlane.f32.xlu0 %v692
        %v694 = vpop.xlane.xlu0 %693
        %v695 = vmax.f32 %v657, %v658
        %696 = vmax.xlane.f32.xlu0 %v695
        %v697 = vpop.xlane.xlu0 %696
        %v698 = vmax.f32 %v659, %v660
        %699 = vmax.xlane.f32.xlu0 %v698
        %v700 = vpop.xlane.xlu0 %699
        %v701 = vmax.f32 %v661, %v662
        %702 = vmax.xlane.f32.xlu0 %v701
        %v703 = vpop.xlane.xlu0 %702
        %v704 = vmax.f32 %v663, %v664
        %705 = vmax.xlane.f32.xlu0 %v704
        %v706 = vpop.xlane.xlu0 %705
        %v707 = vmax.f32 %v665, %v666
        %708 = vmax.xlane.f32.xlu0 %v707
        %v709 = vpop.xlane.xlu0 %708
        %v710 = vmax.f32 %v667, %v668
        %711 = vmax.xlane.f32.xlu0 %v710
        %v712 = vpop.xlane.xlu0 %711
        %v713 = vmax.f32 %v669, %v670
        %714 = vmax.xlane.f32.xlu0 %v713
        %v715 = vpop.xlane.xlu0 %714
        %v716 = vmax.f32 %v671, %v672
        %717 = vmax.xlane.f32.xlu0 %v716
        %v718 = vpop.xlane.xlu0 %717
        %v719 = vmax.f32 %v673, %v674
        %720 = vmax.xlane.f32.xlu0 %v719
        %v721 = vpop.xlane.xlu0 %720
        %v722 = vmax.f32 %v675, %v676
        %723 = vmax.xlane.f32.xlu0 %v722
        %v724 = vpop.xlane.xlu0 %723
        %v725 = vsub.f32 %v645, %v679
        %v726 = vsub.f32 %v646, %v679
        %v727 = vsub.f32 %v647, %v682
        %v728 = vsub.f32 %v648, %v682
        %v729 = vsub.f32 %v649, %v685
        %v730 = vsub.f32 %v650, %v685
        %v731 = vsub.f32 %v651, %v688
        %v732 = vsub.f32 %v652, %v688
        %v733 = vsub.f32 %v653, %v691
        %v734 = vsub.f32 %v654, %v691
        %v735 = vsub.f32 %v655, %v694
        %v736 = vsub.f32 %v656, %v694
        %v737 = vsub.f32 %v657, %v697
        %v738 = vsub.f32 %v658, %v697
        %v739 = vsub.f32 %v659, %v700
        %v740 = vsub.f32 %v660, %v700
        %v741 = vsub.f32 %v661, %v703
        %v742 = vsub.f32 %v662, %v703
        %v743 = vsub.f32 %v663, %v706
        %v744 = vsub.f32 %v664, %v706
        %v745 = vsub.f32 %v665, %v709
        %v746 = vsub.f32 %v666, %v709
        %v747 = vsub.f32 %v667, %v712
        %v748 = vsub.f32 %v668, %v712
        %v749 = vsub.f32 %v669, %v715
        %v750 = vsub.f32 %v670, %v715
        %v751 = vsub.f32 %v671, %v718
        %v752 = vsub.f32 %v672, %v718
        %v753 = vsub.f32 %v673, %v721
        %v754 = vsub.f32 %v674, %v721
        %v755 = vsub.f32 %v675, %v724
        %v756 = vsub.f32 %v676, %v724
        %v757 = vmul.f32 %v725, 1.442695
        %v758 = vpow.pop %v757
        %v759 = vmul.f32 %v726, 1.442695
        %v760 = vpow.pop %v759
        %v761 = vmul.f32 %v727, 1.442695
        %v762 = vpow.pop %v761
        %v763 = vmul.f32 %v728, 1.442695
        %v764 = vpow.pop %v763
        %v765 = vmul.f32 %v729, 1.442695
        %v766 = vpow.pop %v765
        %v767 = vmul.f32 %v730, 1.442695
        %v768 = vpow.pop %v767
        %v769 = vmul.f32 %v731, 1.442695
        %v770 = vpow.pop %v769
        %v771 = vmul.f32 %v732, 1.442695
        %v772 = vpow.pop %v771
        %v773 = vmul.f32 %v733, 1.442695
        %v774 = vpow.pop %v773
        %v775 = vmul.f32 %v734, 1.442695
        %v776 = vpow.pop %v775
        %v777 = vmul.f32 %v735, 1.442695
        %v778 = vpow.pop %v777
        %v779 = vmul.f32 %v736, 1.442695
        %v780 = vpow.pop %v779
        %v781 = vmul.f32 %v737, 1.442695
        %v782 = vpow.pop %v781
        %v783 = vmul.f32 %v738, 1.442695
        %v784 = vpow.pop %v783
        %v785 = vmul.f32 %v739, 1.442695
        %v786 = vpow.pop %v785
        %v787 = vmul.f32 %v740, 1.442695
        %v788 = vpow.pop %v787
        %v789 = vmul.f32 %v741, 1.442695
        %v790 = vpow.pop %v789
        %v791 = vmul.f32 %v742, 1.442695
        %v792 = vpow.pop %v791
        %v793 = vmul.f32 %v743, 1.442695
        %v794 = vpow.pop %v793
        %v795 = vmul.f32 %v744, 1.442695
        %v796 = vpow.pop %v795
        %v797 = vmul.f32 %v745, 1.442695
        %v798 = vpow.pop %v797
        %v799 = vmul.f32 %v746, 1.442695
        %v800 = vpow.pop %v799
        %v801 = vmul.f32 %v747, 1.442695
        %v802 = vpow.pop %v801
        %v803 = vmul.f32 %v748, 1.442695
        %v804 = vpow.pop %v803
        %v805 = vmul.f32 %v749, 1.442695
        %v806 = vpow.pop %v805
        %v807 = vmul.f32 %v750, 1.442695
        %v808 = vpow.pop %v807
        %v809 = vmul.f32 %v751, 1.442695
        %v810 = vpow.pop %v809
        %v811 = vmul.f32 %v752, 1.442695
        %v812 = vpow.pop %v811
        %v813 = vmul.f32 %v753, 1.442695
        %v814 = vpow.pop %v813
        %v815 = vmul.f32 %v754, 1.442695
        %v816 = vpow.pop %v815
        %v817 = vmul.f32 %v755, 1.442695
        %v818 = vpow.pop %v817
        %v819 = vmul.f32 %v756, 1.442695
        %v820 = vpow.pop %v819
        %v821 = vadd.f32 %v758, %v760
        %822 = vadd.xlane.f32.xlu0 %v821
        %v823 = vpop.xlane.xlu0 %822
        %v824 = vadd.f32 %v762, %v764
        %825 = vadd.xlane.f32.xlu0 %v824
        %v826 = vpop.xlane.xlu0 %825
        %v827 = vadd.f32 %v766, %v768
        %828 = vadd.xlane.f32.xlu0 %v827
        %v829 = vpop.xlane.xlu0 %828
        %v830 = vadd.f32 %v770, %v772
        %831 = vadd.xlane.f32.xlu0 %v830
        %v832 = vpop.xlane.xlu0 %831
        %v833 = vadd.f32 %v774, %v776
        %834 = vadd.xlane.f32.xlu0 %v833
        %v835 = vpop.xlane.xlu0 %834
        %v836 = vadd.f32 %v778, %v780
        %837 = vadd.xlane.f32.xlu0 %v836
        %v838 = vpop.xlane.xlu0 %837
        %v839 = vadd.f32 %v782, %v784
        %840 = vadd.xlane.f32.xlu0 %v839
        %v841 = vpop.xlane.xlu0 %840
        %v842 = vadd.f32 %v786, %v788
        %843 = vadd.xlane.f32.xlu0 %v842
        %v844 = vpop.xlane.xlu0 %843
        %v845 = vadd.f32 %v790, %v792
        %846 = vadd.xlane.f32.xlu0 %v845
        %v847 = vpop.xlane.xlu0 %846
        %v848 = vadd.f32 %v794, %v796
        %849 = vadd.xlane.f32.xlu0 %v848
        %v850 = vpop.xlane.xlu0 %849
        %v851 = vadd.f32 %v798, %v800
        %852 = vadd.xlane.f32.xlu0 %v851
        %v853 = vpop.xlane.xlu0 %852
        %v854 = vadd.f32 %v802, %v804
        %855 = vadd.xlane.f32.xlu0 %v854
        %v856 = vpop.xlane.xlu0 %855
        %v857 = vadd.f32 %v806, %v808
        %858 = vadd.xlane.f32.xlu0 %v857
        %v859 = vpop.xlane.xlu0 %858
        %v860 = vadd.f32 %v810, %v812
        %861 = vadd.xlane.f32.xlu0 %v860
        %v862 = vpop.xlane.xlu0 %861
        %v863 = vadd.f32 %v814, %v816
        %864 = vadd.xlane.f32.xlu0 %v863
        %v865 = vpop.xlane.xlu0 %864
        %v866 = vadd.f32 %v818, %v820
        %867 = vadd.xlane.f32.xlu0 %v866
        %v868 = vpop.xlane.xlu0 %867
        %v869 = vrcp.pop %v823
        %v870 = vrcp.pop %v826
        %v871 = vrcp.pop %v829
        %v872 = vrcp.pop %v832
        %v873 = vrcp.pop %v835
        %v874 = vrcp.pop %v838
        %v875 = vrcp.pop %v841
        %v876 = vrcp.pop %v844
        %v877 = vrcp.pop %v847
        %v878 = vrcp.pop %v850
        %v879 = vrcp.pop %v853
        %v880 = vrcp.pop %v856
        %v881 = vrcp.pop %v859
        %v882 = vrcp.pop %v862
        %v883 = vrcp.pop %v865
        %v884 = vrcp.pop %v868
        %v885 = vmul.f32 %v758, %v869
        %v886 = vmul.f32 %v760, %v869
        %v887 = vmul.f32 %v762, %v870
        %v888 = vmul.f32 %v764, %v870
        %v889 = vmul.f32 %v766, %v871
        %v890 = vmul.f32 %v768, %v871
        %v891 = vmul.f32 %v770, %v872
        %v892 = vmul.f32 %v772, %v872
        %v893 = vmul.f32 %v774, %v873
        %v894 = vmul.f32 %v776, %v873
        %v895 = vmul.f32 %v778, %v874
        %v896 = vmul.f32 %v780, %v874
        %v897 = vmul.f32 %v782, %v875
        %v898 = vmul.f32 %v784, %v875
        %v899 = vmul.f32 %v786, %v876
        %v900 = vmul.f32 %v788, %v876
        %v901 = vmul.f32 %v790, %v877
        %v902 = vmul.f32 %v792, %v877
        %v903 = vmul.f32 %v794, %v878
        %v904 = vmul.f32 %v796, %v878
        %v905 = vmul.f32 %v798, %v879
        %v906 = vmul.f32 %v800, %v879
        %v907 = vmul.f32 %v802, %v880
        %v908 = vmul.f32 %v804, %v880
        %v909 = vmul.f32 %v806, %v881
        %v910 = vmul.f32 %v808, %v881
        %v911 = vmul.f32 %v810, %v882
        %v912 = vmul.f32 %v812, %v882
        %v913 = vmul.f32 %v814, %v883
        %v914 = vmul.f32 %v816, %v883
        %v915 = vmul.f32 %v818, %v884
        %v916 = vmul.f32 %v820, %v884
        %917 = vst [vmem:[%s259] sm:$0xff] %v885
        %918 = vst [vmem:[%s259 + $0x8] sm:$0xff] %v886
        %919 = vst [vmem:[%s259 + $0x10] sm:$0xff] %v887
        %920 = vst [vmem:[%s259 + $0x18] sm:$0xff] %v888
        %921 = vst [vmem:[%s259 + $0x20] sm:$0xff] %v889
        %922 = vst [vmem:[%s259 + $0x28] sm:$0xff] %v890
        %923 = vst [vmem:[%s259 + $0x30] sm:$0xff] %v891
        %924 = vst [vmem:[%s259 + $0x38] sm:$0xff] %v892
        %925 = vst [vmem:[%s259 + $0x40] sm:$0xff] %v893
        %926 = vst [vmem:[%s259 + $0x48] sm:$0xff] %v894
        %927 = vst [vmem:[%s259 + $0x50] sm:$0xff] %v895
        %928 = vst [vmem:[%s259 + $0x58] sm:$0xff] %v896
        %929 = vst [vmem:[%s259 + $0x60] sm:$0xff] %v897
        %930 = vst [vmem:[%s259 + $0x68] sm:$0xff] %v898
        %931 = vst [vmem:[%s259 + $0x70] sm:$0xff] %v899
        %932 = vst [vmem:[%s259 + $0x78] sm:$0xff] %v900
        %933 = vst [vmem:[%s259 + $0x80] sm:$0xff] %v901
        %934 = vst [vmem:[%s259 + $0x88] sm:$0xff] %v902
        %935 = vst [vmem:[%s259 + $0x90] sm:$0xff] %v903
        %936 = vst [vmem:[%s259 + $0x98] sm:$0xff] %v904
        %937 = vst [vmem:[%s259 + $0xa0] sm:$0xff] %v905
        %938 = vst [vmem:[%s259 + $0xa8] sm:$0xff] %v906
        %939 = vst [vmem:[%s259 + $0xb0] sm:$0xff] %v907
        %940 = vst [vmem:[%s259 + $0xb8] sm:$0xff] %v908
        %941 = vst [vmem:[%s259 + $0xc0] sm:$0xff] %v909
        %942 = vst [vmem:[%s259 + $0xc8] sm:$0xff] %v910
        %943 = vst [vmem:[%s259 + $0xd0] sm:$0xff] %v911
        %944 = vst [vmem:[%s259 + $0xd8] sm:$0xff] %v912
        %945 = vst [vmem:[%s259 + $0xe0] sm:$0xff] %v913
        %946 = vst [vmem:[%s259 + $0xe8] sm:$0xff] %v914
        %947 = vst [vmem:[%s259 + $0xf0] sm:$0xff] %v915
        %948 = vst [vmem:[%s259 + $0xf8] sm:$0xff] %v916
        %v949 = vld [vmem:[%s279] sm:$0xff]
        %v950 = vld [vmem:[%s279 + $0x8] sm:$0xff]
        %v951 = vld [vmem:[%s279 + $0x10] sm:$0xff]
        %v952 = vld [vmem:[%s279 + $0x18] sm:$0xff]
        %v953 = vld [vmem:[%s279 + $0x20] sm:$0xff]
        %v954 = vld [vmem:[%s279 + $0x28] sm:$0xff]
        %v955 = vld [vmem:[%s279 + $0x30] sm:$0xff]
        %v956 = vld [vmem:[%s279 + $0x38] sm:$0xff]
        %v957 = vld [vmem:[%s279 + $0x40] sm:$0xff]
        %v958 = vld [vmem:[%s279 + $0x48] sm:$0xff]
        %v959 = vld [vmem:[%s279 + $0x50] sm:$0xff]
        %v960 = vld [vmem:[%s279 + $0x58] sm:$0xff]
        %v961 = vld [vmem:[%s279 + $0x60] sm:$0xff]
        %v962 = vld [vmem:[%s279 + $0x68] sm:$0xff]
        %v963 = vld [vmem:[%s279 + $0x70] sm:$0xff]
        %v964 = vld [vmem:[%s279 + $0x78] sm:$0xff]
        %v965 = vld [vmem:[%s279 + $0x80] sm:$0xff]
        %v966 = vld [vmem:[%s279 + $0x88] sm:$0xff]
        %v967 = vld [vmem:[%s279 + $0x90] sm:$0xff]
        %v968 = vld [vmem:[%s279 + $0x98] sm:$0xff]
        %v969 = vld [vmem:[%s279 + $0xa0] sm:$0xff]
        %v970 = vld [vmem:[%s279 + $0xa8] sm:$0xff]
        %v971 = vld [vmem:[%s279 + $0xb0] sm:$0xff]
        %v972 = vld [vmem:[%s279 + $0xb8] sm:$0xff]
        %v973 = vld [vmem:[%s279 + $0xc0] sm:$0xff]
        %v974 = vld [vmem:[%s279 + $0xc8] sm:$0xff]
        %v975 = vld [vmem:[%s279 + $0xd0] sm:$0xff]
        %v976 = vld [vmem:[%s279 + $0xd8] sm:$0xff]
        %v977 = vld [vmem:[%s279 + $0xe0] sm:$0xff]
        %v978 = vld [vmem:[%s279 + $0xe8] sm:$0xff]
        %v979 = vld [vmem:[%s279 + $0xf0] sm:$0xff]
        %v980 = vld [vmem:[%s279 + $0xf8] sm:$0xff]
        %981 = vmatprep.subr.mxu0 0.0
        %982 = vmatpush1.msra.mxu0 %v964
        %983 = vmatprep.subr.mxu0 0.0
        %984 = vmatpush1.msra.mxu0 %v963
        %985 = vmatprep.subr.mxu0 0.0
        %986 = vmatpush1.msra.mxu0 %v962
        %987 = vmatprep.subr.mxu0 0.0
        %988 = vmatpush1.msra.mxu0 %v961
        %989 = vmatprep.subr.mxu0 0.0
        %990 = vmatpush1.msra.mxu0 %v960
        %991 = vmatprep.subr.mxu0 0.0
        %992 = vmatpush1.msra.mxu0 %v959
        %993 = vmatprep.subr.mxu0 0.0
        %994 = vmatpush1.msra.mxu0 %v958
        %995 = vmatprep.subr.mxu0 0.0
        %996 = vmatpush1.msra.mxu0 %v957
        %997 = vmatprep.subr.mxu0 0.0
        %998 = vmatpush1.msra.mxu0 %v956
        %999 = vmatprep.subr.mxu0 0.0
        %1000 = vmatpush1.msra.mxu0 %v955
        %1001 = vmatprep.subr.mxu0 0.0
        %1002 = vmatpush1.msra.mxu0 %v954
        %1003 = vmatprep.subr.mxu0 0.0
        %1004 = vmatpush1.msra.mxu0 %v953
        %1005 = vmatprep.subr.mxu0 0.0
        %1006 = vmatpush1.msra.mxu0 %v952
        %1007 = vmatprep.subr.mxu0 0.0
        %1008 = vmatpush1.msra.mxu0 %v951
        %1009 = vmatprep.subr.mxu0 0.0
        %1010 = vmatpush1.msra.mxu0 %v950
        %1011 = vmatprep.subr.mxu0 0.0
        %1012 = vmatpush1.msra.mxu0 %v949
        %1013 = vmatprep.subr.mxu0 0.0
        %1014 = vmatpush2.msra.mxu0 %v980
        %1015 = vmatprep.subr.mxu0 0.0
        %1016 = vmatpush2.msra.mxu0 %v979
        %1017 = vmatprep.subr.mxu0 0.0
        %1018 = vmatpush2.msra.mxu0 %v978
        %1019 = vmatprep.subr.mxu0 0.0
        %1020 = vmatpush2.msra.mxu0 %v977
        %1021 = vmatprep.subr.mxu0 0.0
        %1022 = vmatpush2.msra.mxu0 %v976
        %1023 = vmatprep.subr.mxu0 0.0
        %1024 = vmatpush2.msra.mxu0 %v975
        %1025 = vmatprep.subr.mxu0 0.0
        %1026 = vmatpush2.msra.mxu0 %v974
        %1027 = vmatprep.subr.mxu0 0.0
        %1028 = vmatpush2.msra.mxu0 %v973
        %1029 = vmatprep.subr.mxu0 0.0
        %1030 = vmatpush2.msra.mxu0 %v972
        %1031 = vmatprep.subr.mxu0 0.0
        %1032 = vmatpush2.msra.mxu0 %v971
        %1033 = vmatprep.subr.mxu0 0.0
        %1034 = vmatpush2.msra.mxu0 %v970
        %1035 = vmatprep.subr.mxu0 0.0
        %1036 = vmatpush2.msra.mxu0 %v969
        %1037 = vmatprep.subr.mxu0 0.0
        %1038 = vmatpush2.msra.mxu0 %v968
        %1039 = vmatprep.subr.mxu0 0.0
        %1040 = vmatpush2.msra.mxu0 %v967
        %1041 = vmatprep.subr.mxu0 0.0
        %1042 = vmatpush2.msra.mxu0 %v966
        %1043 = vmatprep.subr.mxu0 0.0
        %1044 = vmatpush2.msra.mxu0 %v965
        %1045 = vmatprep.mubr.f32.mxu0 %v886
        %1046 = vmatmul.mubr.f32.gmra.mxu0 %v885
        %v1047 = vpop.f32.mrf.mxu0
        %v1048 = vadd.f32 0.0, %v1047
        %v1049 = vpop.f32.mrf.mxu0
        %1050 = vmatprep.mubr.f32.mxu0 %v888
        %1051 = vmatmul.mubr.f32.gmra.mxu0 %v887
        %v1052 = vpop.f32.mrf.mxu0
        %v1053 = vadd.f32 0.0, %v1052
        %v1054 = vpop.f32.mrf.mxu0
        %1055 = vmatprep.mubr.f32.mxu0 %v890
        %1056 = vmatmul.mubr.f32.gmra.mxu0 %v889
        %v1057 = vpop.f32.mrf.mxu0
        %v1058 = vadd.f32 0.0, %v1057
        %v1059 = vpop.f32.mrf.mxu0
        %1060 = vmatprep.mubr.f32.mxu0 %v892
        %1061 = vmatmul.mubr.f32.gmra.mxu0 %v891
        %v1062 = vpop.f32.mrf.mxu0
        %v1063 = vadd.f32 0.0, %v1062
        %v1064 = vpop.f32.mrf.mxu0
        %1065 = vmatprep.mubr.f32.mxu0 %v894
        %1066 = vmatmul.mubr.f32.gmra.mxu0 %v893
        %v1067 = vpop.f32.mrf.mxu0
        %v1068 = vadd.f32 0.0, %v1067
        %v1069 = vpop.f32.mrf.mxu0
        %1070 = vmatprep.mubr.f32.mxu0 %v896
        %1071 = vmatmul.mubr.f32.gmra.mxu0 %v895
        %v1072 = vpop.f32.mrf.mxu0
        %v1073 = vadd.f32 0.0, %v1072
        %v1074 = vpop.f32.mrf.mxu0
        %1075 = vmatprep.mubr.f32.mxu0 %v898
        %1076 = vmatmul.mubr.f32.gmra.mxu0 %v897
        %v1077 = vpop.f32.mrf.mxu0
        %v1078 = vadd.f32 0.0, %v1077
        %v1079 = vpop.f32.mrf.mxu0
        %1080 = vmatprep.mubr.f32.mxu0 %v900
        %1081 = vmatmul.mubr.f32.gmra.mxu0 %v899
        %v1082 = vpop.f32.mrf.mxu0
        %v1083 = vadd.f32 0.0, %v1082
        %v1084 = vpop.f32.mrf.mxu0
        %1085 = vmatprep.mubr.f32.mxu0 %v902
        %1086 = vmatmul.mubr.f32.gmra.mxu0 %v901
        %v1087 = vpop.f32.mrf.mxu0
        %v1088 = vadd.f32 0.0, %v1087
        %v1089 = vpop.f32.mrf.mxu0
        %1090 = vmatprep.mubr.f32.mxu0 %v904
        %1091 = vmatmul.mubr.f32.gmra.mxu0 %v903
        %v1092 = vpop.f32.mrf.mxu0
        %v1093 = vadd.f32 0.0, %v1092
        %v1094 = vpop.f32.mrf.mxu0
        %1095 = vmatprep.mubr.f32.mxu0 %v906
        %1096 = vmatmul.mubr.f32.gmra.mxu0 %v905
        %v1097 = vpop.f32.mrf.mxu0
        %v1098 = vadd.f32 0.0, %v1097
        %v1099 = vpop.f32.mrf.mxu0
        %1100 = vmatprep.mubr.f32.mxu0 %v908
        %1101 = vmatmul.mubr.f32.gmra.mxu0 %v907
        %v1102 = vpop.f32.mrf.mxu0
        %v1103 = vadd.f32 0.0, %v1102
        %v1104 = vpop.f32.mrf.mxu0
        %1105 = vmatprep.mubr.f32.mxu0 %v910
        %1106 = vmatmul.mubr.f32.gmra.mxu0 %v909
        %v1107 = vpop.f32.mrf.mxu0
        %v1108 = vadd.f32 0.0, %v1107
        %v1109 = vpop.f32.mrf.mxu0
        %1110 = vmatprep.mubr.f32.mxu0 %v912
        %1111 = vmatmul.mubr.f32.gmra.mxu0 %v911
        %v1112 = vpop.f32.mrf.mxu0
        %v1113 = vadd.f32 0.0, %v1112
        %v1114 = vpop.f32.mrf.mxu0
        %1115 = vmatprep.mubr.f32.mxu0 %v914
        %1116 = vmatmul.mubr.f32.gmra.mxu0 %v913
        %v1117 = vpop.f32.mrf.mxu0
        %v1118 = vadd.f32 0.0, %v1117
        %v1119 = vpop.f32.mrf.mxu0
        %1120 = vmatprep.mubr.f32.mxu0 %v916
        %1121 = vmatmul.mubr.f32.gmra.mxu0 %v915
        %v1122 = vpop.f32.mrf.mxu0
        %v1123 = vadd.f32 0.0, %v1122
        %v1124 = vpop.f32.mrf.mxu0
        %1125 = vdwg.mxu0
        %1126 = vst.msk [vmem:[%s288] sm:$0xff] %vm339, %v1048
        %1127 = vst.msk [vmem:[%s288 + $0x8] sm:$0xff] %vm339, %v1053
        %1128 = vst.msk [vmem:[%s288 + $0x10] sm:$0xff] %vm339, %v1058
        %1129 = vst.msk [vmem:[%s288 + $0x18] sm:$0xff] %vm339, %v1063
        %1130 = vst.msk [vmem:[%s288 + $0x20] sm:$0xff] %vm339, %v1068
        %1131 = vst.msk [vmem:[%s288 + $0x28] sm:$0xff] %vm339, %v1073
        %1132 = vst.msk [vmem:[%s288 + $0x30] sm:$0xff] %vm339, %v1078
        %1133 = vst.msk [vmem:[%s288 + $0x38] sm:$0xff] %vm339, %v1083
        %1134 = vst.msk [vmem:[%s288 + $0x40] sm:$0xff] %vm339, %v1088
        %1135 = vst.msk [vmem:[%s288 + $0x48] sm:$0xff] %vm339, %v1093
        %1136 = vst.msk [vmem:[%s288 + $0x50] sm:$0xff] %vm339, %v1098
        %1137 = vst.msk [vmem:[%s288 + $0x58] sm:$0xff] %vm339, %v1103
        %1138 = vst.msk [vmem:[%s288 + $0x60] sm:$0xff] %vm339, %v1108
        %1139 = vst.msk [vmem:[%s288 + $0x68] sm:$0xff] %vm339, %v1113
        %1140 = vst.msk [vmem:[%s288 + $0x70] sm:$0xff] %vm339, %v1118
        %1141 = vst.msk [vmem:[%s288 + $0x78] sm:$0xff] %vm339, %v1123
        %s1142 = smul.u32 16, %s24
        %p1143 = scmp.lt.s32.totalorder %s23, 7
        %s1144 = scalar_select %p1143, %s23, 7
        %p1145 = scmp.lt.s32.totalorder %s1142, 31
        %s1146 = scalar_select %p1145, %s1142, 31
        %s1147 = smul.addr %s1144, 32
        %s1148 = sadd.s32 %s1146, %s1147
        %s1149 = smul.addr %s1148, 8
        %s1150 = scalar_lea.vmem %s3, %s1149
        %s1151 = sand.u32 %s149, 1
        %s1152 = scalar_lea.sflag [#allocation3], %s1151
        %s1153 = sand.u32 %s149, 1
        %s1154 = smul.addr %s1153, 256
        %s1155 = scalar_lea.vmem [#allocation2], %s1154
        // Predicated region
        $region33: #{tpu_custom_call.1} parent=31 // pred_check
          %p1156 = pneg %p131
        $region34: #{tpu_custom_call.1} parent=31 // pred_check_branch
          %1158 = sbr.rel (%p1156) target = $region36
        $region35: #{tpu_custom_call.1} parent=31 // pred_region
          %s1159 = smul.u32 16, %s24
        $region36: #{tpu_custom_call.1} parent=31 // pred_fallthru
          _
        // Predicated region
        $region37: #{tpu_custom_call.1} parent=31 // pred_check
          %p1160 = pneg %p159
        $region38: #{tpu_custom_call.1} parent=31 // pred_check_branch
          %1162 = sbr.rel (%p1160) target = $region40
        $region39: #{tpu_custom_call.1} parent=31 // pred_region
          %s1163 = smul.u32 16, %s24
          %s1165 = ssub.s32 4096, 4096
          %1166 = vsyncadd %s1152, %s1165
          %s1167 = smul.addr %s1163, 2
          %s1168 = smul.addr %s23, 64
          %s1169 = sadd.s32 %s1167, %s1168
          %s1170 = smul.addr %s1169, 128
          %s1171 = scalar_lea.hbm %s4, %s1170
          %s1172 = sshll.u32 %s1155, 4
          %s1173 = int_to_ptr.vmem [resolvable:$true] %s1172
          %1178 = dma.vmem_to_hbm [thread:$0]  %s1173, 4096, %s1171, %s1152, 256, 256, 16
        $region40: #{tpu_custom_call.1} parent=31 // pred_fallthru
          _
      $region32: #{tpu_custom_call.1} parent=5 // pred_fallthru
        _
      %p1179 = scmp.le.s32.totalorder 2, %s14
      // Predicated region
      $region41: #{tpu_custom_call.1} parent=5 // pred_check
        %p1180 = pneg %p1179
      $region42: #{tpu_custom_call.1} parent=5 // pred_check_branch
        %1182 = sbr.rel (%p1180) target = $region44
      $region43: #{tpu_custom_call.1} parent=5 // pred_region
        %s1183 = ssub.s32 %s14, 2
        // Predicated region
        $region45: #{tpu_custom_call.1} parent=43 // pred_check
          %p1184 = pneg %p137
        $region46: #{tpu_custom_call.1} parent=43 // pred_check_branch
          %1186 = sbr.rel (%p1184) target = $region48
        $region47: #{tpu_custom_call.1} parent=43 // pred_region
          %s1187 = smul.u32 16, %s26
          %p1188 = scmp.lt.s32.totalorder %s25, 7
          %s1189 = scalar_select %p1188, %s25, 7
          %p1190 = scmp.lt.s32.totalorder %s1187, 31
          %s1191 = scalar_select %p1190, %s1187, 31
          %s1192 = smul.addr %s1189, 32
          %s1193 = sadd.s32 %s1191, %s1192
          %s1194 = smul.addr %s1193, 8
          %s1195 = scalar_lea.vmem %s3, %s1194
        $region48: #{tpu_custom_call.1} parent=43 // pred_fallthru
          _
        // Predicated region
        $region49: #{tpu_custom_call.1} parent=43 // pred_check
          %p1196 = pneg %p165
        $region50: #{tpu_custom_call.1} parent=43 // pred_check_branch
          %1198 = sbr.rel (%p1196) target = $region52
        $region51: #{tpu_custom_call.1} parent=43 // pred_region
          %s1199 = sand.u32 %s150, 1
          %s1200 = scalar_lea.sflag [#allocation3], %s1199
          %s1201 = sand.u32 %s150, 1
          %s1202 = smul.addr %s1201, 256
          %s1203 = scalar_lea.vmem [#allocation2], %s1202
          %1204 = dma.done %s1200, 4096
        $region52: #{tpu_custom_call.1} parent=43 // pred_fallthru
          _
      $region44: #{tpu_custom_call.1} parent=5 // pred_fallthru
        _
    $region6: #{tpu_custom_call.1} parent=1 // loop_footer
      %s18 = sadd.s32 1, %s14
    $region7: #{tpu_custom_call.1} parent=1 // loop_footer_branch
      %13 = sbr.rel target = $region3
    $region8: #{tpu_custom_call.1} parent=1 // loop_exit
      _
    %1205 = vsyncpa [#allocation3], 1
    %s1206 = scalar_lea.sflag [#allocation3], 1
    %1207 = vsyncpa %s1206, 1

</llo_original>
